<compile_context>
chip_gen: v7x
topology: tpu7x:2x2x1
jax: 0.10.0
libtpu: 0.0.40
codegen_flags: <defaults>
</compile_context>

<pallas_src>
import functools

import jax
import jax.numpy as jnp
from jax import lax
from jax.experimental import pallas as pl
from jax.experimental.pallas import tpu as pltpu

_HIDDEN = 200      # hidden width of both branches
_CHUNK = 128       # lane chunk kept register-resident per inner-loop step


def _round_up(a, b):
    return (a + b - 1) // b * b


def _neury_kernel(xy_ref, w1_ref, w2t_ref, b2_ref, o_ref):
    """Fused radial+angular MLP + hard enforcement, batch on lanes.

    xy_ref : (2, TILE)     row 0 = x, row 1 = y                     (float32)
    w1_ref : (200, 512)    [w1_rad | b1_rad | w1_ang | b1_ang], each column
                           replicated across 128 lanes               (layer-1 dtype)
    w2t_ref: (4, 200)      rows 0-1 = radial W2^T, rows 2-3 = angular W2^T
    b2_ref : (4, 128)      second-layer bias, lane-replicated        (float32)
    o_ref  : (4, TILE)     rows 0-1 = frad^T, rows 2-3 = gang^T      (float32)
    """
    n_chunks = o_ref.shape[1] // _CHUNK
    w_dtype = w1_ref.dtype

    def branch(v, col0, row0, shift):
        # Layer 1 is rank-1 (K=1): broadcast FMA on the VPU, tanh on the EUP.
        h = jnp.tanh(w1_ref[:, col0:col0 + _CHUNK] * v.astype(w_dtype)
                     + w1_ref[:, col0 + _CHUNK:col0 + 2 * _CHUNK])  # (200,128)
        # Layer 2 on the MXU with f32 accumulation, then tanh (tiny, f32).
        p = jnp.tanh(
            jnp.dot(w2t_ref[row0:row0 + 2, :], h,
                    preferred_element_type=jnp.float32)
            + b2_ref[row0:row0 + 2, :])                             # (2, 128)
        # Hard enforcement in f32.
        return jnp.exp(v + shift) * p + 1.0                         # (2, 128)

    def chunk_body(c, carry):
        off = pl.multiple_of(c * _CHUNK, _CHUNK)
        x = xy_ref[0:1, pl.ds(off, _CHUNK)]                         # (1, 128)
        y = xy_ref[1:2, pl.ds(off, _CHUNK)]                         # (1, 128)
        # Radial branch finishes (compute + store) before angular starts, so
        # only one (200, 128) hidden block is live at a time.
        o_ref[0:2, pl.ds(off, _CHUNK)] = branch(x, 0, 0, -1.0)
        o_ref[2:4, pl.ds(off, _CHUNK)] = branch(y, 2 * _CHUNK, 2, 1.0)
        return carry

    lax.fori_loop(0, n_chunks, chunk_body, None, unroll=True)


def neury_forward(x, y, params, *, tile_n=2048, layer1_dtype=jnp.float32):
    """Pallas equivalent of Neury.forward. Returns [frad, gang], each (N, 2).

    layer1_dtype=jnp.bfloat16 is an optional fast path for v6e/v7x (bf16
    EUP/VPU); keep the default float32 on v5e and for tight tolerances.
    """
    n = x.shape[0]

    # Lane-dense transposed input: row 0 = x, row 1 = y, padded to 128 lanes.
    xy = jnp.concatenate([x.T, y.T], axis=0).astype(jnp.float32)     # (2, N)
    padded = _round_up(max(n, 1), _CHUNK)
    if padded != n:
        xy = jnp.pad(xy, ((0, 0), (0, padded - n)))

    # Tile is a multiple of 128; the grid uses cdiv, so the last block may be
    # partial (Pallas masks the out-of-bounds writeback / garbage pad lanes
    # never leave the kernel).
    tile = min(_round_up(tile_n, _CHUNK), padded)
    grid = pl.cdiv(padded, tile)

    # Layer-1 weights/biases pre-replicated across 128 lanes and packed into a
    # single slab (layout plumbing in the wrapper, not compute).
    def rep(col):                                      # (200, 1) -> (200, 128)
        return jnp.broadcast_to(col.astype(jnp.float32), (_HIDDEN, _CHUNK))

    w1pack = jnp.concatenate(
        [rep(params["rad_w1"].T), rep(params["rad_b1"].T),
         rep(params["ang_w1"].T), rep(params["ang_b1"].T)],
        axis=1).astype(layer1_dtype)                                 # (200, 512)
    w2t = jnp.concatenate(
        [params["rad_w2"].T, params["ang_w2"].T],
        axis=0).astype(layer1_dtype)                                 # (4, 200)
    b2 = jnp.broadcast_to(
        jnp.concatenate([params["rad_b2"].T, params["ang_b2"].T], axis=0),
        (4, _CHUNK)).astype(jnp.float32)                             # (4, 128)

    const = lambda i: (0, 0)        # weights stay VMEM-resident across steps
    out = pl.pallas_call(
        _neury_kernel,
        out_shape=jax.ShapeDtypeStruct((4, padded), jnp.float32),
        grid_spec=pltpu.PrefetchScalarGridSpec(
            num_scalar_prefetch=0,
            grid=(grid,),
            in_specs=[
                pl.BlockSpec((2, tile), lambda i: (0, i)),           # xy
                pl.BlockSpec((_HIDDEN, 4 * _CHUNK), const),          # w1/b1 slab
                pl.BlockSpec((4, _HIDDEN), const),                   # w2^T both
                pl.BlockSpec((4, _CHUNK), const),                    # b2 both
            ],
            out_specs=pl.BlockSpec((4, tile), lambda i: (0, i)),
        ),
        # TODO(synk): on v7x, switch dimension_semantics to
        # (pltpu.CORE_PARALLEL,) (or split the batch axis via core_map) for
        # true dual-TensorCore sharding; "parallel" is kept here because it is
        # safe on all of v5e / v6e / v7x.
        compiler_params=pltpu.CompilerParams(
            dimension_semantics=("parallel",),
            vmem_limit_bytes=32 * 1024 * 1024,   # well inside v7x's 64 MiB VMEM
        ),
    )(xy, w1pack, w2t, b2)

    out = out[:, :n]
    frad = out[0:2, :].T                                             # (N, 2)
    gang = out[2:4, :].T                                             # (N, 2)
    return [frad, gang]


def init_params(key):
    """Deterministic init mimicking nn.Linear (uniform(-1/sqrt(fan_in), +))."""
    ks = jax.random.split(key, 8)

    def lin(kw, kb, fan_in, fan_out):
        bound = 1.0 / jnp.sqrt(jnp.float32(fan_in))
        w = jax.random.uniform(kw, (fan_in, fan_out), jnp.float32, -bound, bound)
        b = jax.random.uniform(kb, (1, fan_out), jnp.float32, -bound, bound)
        return w, b

    rad_w1, rad_b1 = lin(ks[0], ks[1], 1, _HIDDEN)
    rad_w2, rad_b2 = lin(ks[2], ks[3], _HIDDEN, 2)
    ang_w1, ang_b1 = lin(ks[4], ks[5], 1, _HIDDEN)
    ang_w2, ang_b2 = lin(ks[6], ks[7], _HIDDEN, 2)
    return dict(
        rad_w1=rad_w1, rad_b1=rad_b1, rad_w2=rad_w2, rad_b2=rad_b2,
        ang_w1=ang_w1, ang_b1=ang_b1, ang_w2=ang_w2, ang_b2=ang_b2,
    )


def _reference(x, y, params):
    """Pure-JAX reference for correctness check."""
    def branch(v, w1, b1, w2, b2, shift):
        h = jnp.tanh(v @ w1 + b1)
        p = jnp.tanh(h @ w2 + b2)
        return jnp.exp(v + shift) * p + 1.0

    frad = branch(x, params["rad_w1"], params["rad_b1"],
                  params["rad_w2"], params["rad_b2"], -1.0)
    gang = branch(y, params["ang_w1"], params["ang_b1"],
                  params["ang_w2"], params["ang_b2"], 1.0)
    return frad, gang


if __name__ == "__main__":
    key = jax.random.PRNGKey(0)
    kp, kx, ky = jax.random.split(key, 3)
    params = init_params(kp)

    # Primary small check: one grid step, one 128-lane chunk.
    N = 8
    x = jax.random.uniform(kx, (N, 1), jnp.float32)      # radial coordinate
    y = jax.random.uniform(ky, (N, 1), jnp.float32)      # angular coordinate
    frad, gang = jax.jit(neury_forward)(x, y, params)
    jax.block_until_ready(frad)
    jax.block_until_ready(gang)
    frad_ref, gang_ref = _reference(x, y, params)
    assert frad.shape == (N, 2) and gang.shape == (N, 2)
    assert jnp.allclose(frad, frad_ref, atol=1e-5, rtol=1e-5)
    assert jnp.allclose(gang, gang_ref, atol=1e-5, rtol=1e-5)

    # Secondary check: multi-chunk inner loop + cdiv grid with a partial last
    # block (N=300 -> 384 padded lanes, tile=256 -> 2 grid steps).
    N2 = 300
    kx2, ky2 = jax.random.split(jax.random.PRNGKey(1), 2)
    x2 = jax.random.uniform(kx2, (N2, 1), jnp.float32)
    y2 = jax.random.uniform(ky2, (N2, 1), jnp.float32)
    fwd2 = jax.jit(functools.partial(neury_forward, tile_n=256))
    frad2, gang2 = fwd2(x2, y2, params)
    jax.block_until_ready(frad2)
    jax.block_until_ready(gang2)
    frad2_ref, gang2_ref = _reference(x2, y2, params)
    assert frad2.shape == (N2, 2) and gang2.shape == (N2, 2)
    assert jnp.allclose(frad2, frad2_ref, atol=1e-5, rtol=1e-5)
    assert jnp.allclose(gang2, gang2_ref, atol=1e-5, rtol=1e-5)

    print("KERNEL_OK")
</pallas_src>

<mosaic_0001>
module attributes {stable_mosaic.version = 11 : i64} {
  func.func @_neury_kernel(%arg0: i32, %arg1: memref<2x128xf32, #tpu.memory_space<vmem>>, %arg2: memref<200x512xf32, #tpu.memory_space<vmem>>, %arg3: memref<4x200xf32, #tpu.memory_space<vmem>>, %arg4: memref<4x128xf32, #tpu.memory_space<vmem>>, %arg5: memref<4x128xf32, #tpu.memory_space<vmem>>) attributes {dimension_semantics = [#tpu.dimension_semantics<parallel>], iteration_bounds = array<i64: 1>, scalar_prefetch = 0 : i64, scratch_operands = 0 : i64, tpu.core_type = #tpu.core_type<tc>, window_params = [{transform_indices = @transform_0, window_bounds = array<i64: 2, 128>}, {pipeline_mode = #tpu.pipeline_mode<synchronous>, transform_indices = @transform_1, window_bounds = array<i64: 200, 512>}, {pipeline_mode = #tpu.pipeline_mode<synchronous>, transform_indices = @transform_2, window_bounds = array<i64: 4, 200>}, {pipeline_mode = #tpu.pipeline_mode<synchronous>, transform_indices = @transform_3, window_bounds = array<i64: 4, 128>}, {transform_indices = @transform_4, window_bounds = array<i64: 4, 128>}]} {
    %c0_i32 = arith.constant 0 : i32
    %c128_i32 = arith.constant 128 : i32
    %0 = arith.muli %c0_i32, %c128_i32 : i32
    %1 = tpu.assume_multiple %0, 128 : i32
    %c0 = arith.constant 0 : index
    %2 = arith.index_cast %1 : i32 to index
    %3 = vector.load %arg1[%c0, %2] : memref<2x128xf32, #tpu.memory_space<vmem>>, vector<1x128xf32>
    %c1 = arith.constant 1 : index
    %4 = arith.index_cast %1 : i32 to index
    %5 = vector.load %arg1[%c1, %4] : memref<2x128xf32, #tpu.memory_space<vmem>>, vector<1x128xf32>
    %c0_0 = arith.constant 0 : index
    %c0_1 = arith.constant 0 : index
    %6 = vector.load %arg2[%c0_0, %c0_1] : memref<200x512xf32, #tpu.memory_space<vmem>>, vector<200x128xf32>
    %7 = vector.broadcast %3 : vector<1x128xf32> to vector<200x128xf32>
    %8 = arith.mulf %6, %7 : vector<200x128xf32>
    %c0_2 = arith.constant 0 : index
    %c128 = arith.constant 128 : index
    %9 = vector.load %arg2[%c0_2, %c128] : memref<200x512xf32, #tpu.memory_space<vmem>>, vector<200x128xf32>
    %10 = arith.addf %8, %9 : vector<200x128xf32>
    %11 = math.tanh %10 : vector<200x128xf32>
    %c0_3 = arith.constant 0 : index
    %c0_4 = arith.constant 0 : index
    %12 = vector.load %arg3[%c0_3, %c0_4] : memref<4x200xf32, #tpu.memory_space<vmem>>, vector<2x200xf32>
    %cst = arith.constant dense<0.000000e+00> : vector<2x128xf32>
    %13 = tpu.matmul %12, %11, %cst {dimension_numbers = #tpu.dot_dimension_numbers<[1], [0], [0], [1], [0, 0, 1, 1], [], []>} : vector<2x200xf32>, vector<200x128xf32>, vector<2x128xf32> -> vector<2x128xf32>
    %c0_5 = arith.constant 0 : index
    %c0_6 = arith.constant 0 : index
    %14 = vector.load %arg4[%c0_5, %c0_6] : memref<4x128xf32, #tpu.memory_space<vmem>>, vector<2x128xf32>
    %15 = arith.addf %13, %14 : vector<2x128xf32>
    %16 = math.tanh %15 : vector<2x128xf32>
    %cst_7 = arith.constant -1.000000e+00 : f32
    %17 = vector.broadcast %cst_7 : f32 to vector<1x128xf32>
    %18 = arith.addf %3, %17 : vector<1x128xf32>
    %19 = math.exp %18 : vector<1x128xf32>
    %20 = vector.broadcast %19 : vector<1x128xf32> to vector<2x128xf32>
    %21 = arith.mulf %20, %16 : vector<2x128xf32>
    %cst_8 = arith.constant 1.000000e+00 : f32
    %22 = vector.broadcast %cst_8 : f32 to vector<2x128xf32>
    %23 = arith.addf %21, %22 : vector<2x128xf32>
    %c0_9 = arith.constant 0 : index
    %24 = arith.index_cast %1 : i32 to index
    %25 = vector.load %arg5[%c0_9, %24] : memref<4x128xf32, #tpu.memory_space<vmem>>, vector<2x128xf32>
    tpu.vector_store %arg5[%c0_9, %24], %23 {strides = array<i32>} : memref<4x128xf32, #tpu.memory_space<vmem>>, vector<2x128xf32>,
    %c0_10 = arith.constant 0 : index
    %c256 = arith.constant 256 : index
    %26 = vector.load %arg2[%c0_10, %c256] : memref<200x512xf32, #tpu.memory_space<vmem>>, vector<200x128xf32>
    %27 = vector.broadcast %5 : vector<1x128xf32> to vector<200x128xf32>
    %28 = arith.mulf %26, %27 : vector<200x128xf32>
    %c0_11 = arith.constant 0 : index
    %c384 = arith.constant 384 : index
    %29 = vector.load %arg2[%c0_11, %c384] : memref<200x512xf32, #tpu.memory_space<vmem>>, vector<200x128xf32>
    %30 = arith.addf %28, %29 : vector<200x128xf32>
    %31 = math.tanh %30 : vector<200x128xf32>
    %c2 = arith.constant 2 : index
    %c0_12 = arith.constant 0 : index
    %32 = vector.load %arg3[%c2, %c0_12] : memref<4x200xf32, #tpu.memory_space<vmem>>, vector<2x200xf32>
    %cst_13 = arith.constant dense<0.000000e+00> : vector<2x128xf32>
    %33 = tpu.matmul %32, %31, %cst_13 {dimension_numbers = #tpu.dot_dimension_numbers<[1], [0], [0], [1], [0, 0, 1, 1], [], []>} : vector<2x200xf32>, vector<200x128xf32>, vector<2x128xf32> -> vector<2x128xf32>
    %c2_14 = arith.constant 2 : index
    %c0_15 = arith.constant 0 : index
    %34 = vector.load %arg4[%c2_14, %c0_15] : memref<4x128xf32, #tpu.memory_space<vmem>>, vector<2x128xf32>
    %35 = arith.addf %33, %34 : vector<2x128xf32>
    %36 = math.tanh %35 : vector<2x128xf32>
    %cst_16 = arith.constant 1.000000e+00 : f32
    %37 = vector.broadcast %cst_16 : f32 to vector<1x128xf32>
    %38 = arith.addf %5, %37 : vector<1x128xf32>
    %39 = math.exp %38 : vector<1x128xf32>
    %40 = vector.broadcast %39 : vector<1x128xf32> to vector<2x128xf32>
    %41 = arith.mulf %40, %36 : vector<2x128xf32>
    %cst_17 = arith.constant 1.000000e+00 : f32
    %42 = vector.broadcast %cst_17 : f32 to vector<2x128xf32>
    %43 = arith.addf %41, %42 : vector<2x128xf32>
    %c2_18 = arith.constant 2 : index
    %44 = arith.index_cast %1 : i32 to index
    %45 = vector.load %arg5[%c2_18, %44] : memref<4x128xf32, #tpu.memory_space<vmem>>, vector<2x128xf32>
    tpu.vector_store %arg5[%c2_18, %44], %43 {strides = array<i32>} : memref<4x128xf32, #tpu.memory_space<vmem>>, vector<2x128xf32>,
    %c1_i32 = arith.constant 1 : i32
    return
  }
  func.func @transform_0(%arg0: i32) -> (i32, i32) {
    %c0_i32 = arith.constant 0 : i32
    %c0_i32_0 = arith.constant 0 : i32
    return %c0_i32, %arg0 : i32, i32
  }
  func.func @transform_1(%arg0: i32) -> (i32, i32) {
    %c0_i32 = arith.constant 0 : i32
    %c0_i32_0 = arith.constant 0 : i32
    %c0_i32_1 = arith.constant 0 : i32
    return %c0_i32, %c0_i32_0 : i32, i32
  }
  func.func @transform_2(%arg0: i32) -> (i32, i32) {
    %c0_i32 = arith.constant 0 : i32
    %c0_i32_0 = arith.constant 0 : i32
    %c0_i32_1 = arith.constant 0 : i32
    return %c0_i32, %c0_i32_0 : i32, i32
  }
  func.func @transform_3(%arg0: i32) -> (i32, i32) {
    %c0_i32 = arith.constant 0 : i32
    %c0_i32_0 = arith.constant 0 : i32
    %c0_i32_1 = arith.constant 0 : i32
    return %c0_i32, %c0_i32_0 : i32, i32
  }
  func.func @transform_4(%arg0: i32) -> (i32, i32) {
    %c0_i32 = arith.constant 0 : i32
    %c0_i32_0 = arith.constant 0 : i32
    return %c0_i32, %arg0 : i32, i32
  }
}

</mosaic_0001>

<llo_original>
// kernel: neury_forward.1
$region0: #{neury_forward.1}
  #allocation0 [shape = 'u32[]', space=smem, size = 0x4, offset = 0x4, fixed_abs, tag = 'smem constant byte address 0x4 - core index']
  #allocation1 [shape = 'u32[144,128]{1,0:T(1,128)}', space=vmem, size = 0x12000, scoped, tag = 'internal scratch']
  %s0 = inlined_call_operand.vmem [shape: f32[2,128], index: 0, kind: input, shape index: {}]
  %s1 = inlined_call_operand.vmem [shape: f32[200,512], index: 1, kind: input, shape index: {}]
  %s2 = inlined_call_operand.vmem [shape: f32[4,200], index: 2, kind: input, shape index: {}]
  %s3 = inlined_call_operand.vmem [shape: f32[4,128], index: 3, kind: input, shape index: {}]
  %s4 = inlined_call_operand.vmem [shape: f32[4,128], index: 4, kind: output, shape index: {}]
  %s5 = sld [smem:[#allocation0]]
  $region26: #{neury_forward.1} parent=0
    _
  %s7 = ssub.s32 1, %s5
  %s8 = scalar_select 0, %s7, %s5
  // Predicated region
  $region2: #{neury_forward.1} parent=0 // pred_check
    _
  $region3: #{neury_forward.1} parent=0 // pred_check_branch
    %10 = sbr.rel (0) target = $region5
  $region4: #{neury_forward.1} parent=0 // pred_region
    _
  $region5: #{neury_forward.1} parent=0 // pred_fallthru
    _
  // Predicated region
  $region6: #{neury_forward.1} parent=0 // pred_check
    _
  $region7: #{neury_forward.1} parent=0 // pred_check_branch
    %12 = sbr.rel (0) target = $region9
  $region8: #{neury_forward.1} parent=0 // pred_region
    _
  $region9: #{neury_forward.1} parent=0 // pred_fallthru
    _
  // Predicated region
  $region10: #{neury_forward.1} parent=0 // pred_check
    _
  $region11: #{neury_forward.1} parent=0 // pred_check_branch
    %14 = sbr.rel (0) target = $region13
  $region12: #{neury_forward.1} parent=0 // pred_region
    _
  $region13: #{neury_forward.1} parent=0 // pred_fallthru
    _
  // Predicated region
  $region14: #{neury_forward.1} parent=0 // pred_check
    _
  $region15: #{neury_forward.1} parent=0 // pred_check_branch
    %16 = sbr.rel (0) target = $region17
  $region16: #{neury_forward.1} parent=0 // pred_region
    _
  $region17: #{neury_forward.1} parent=0 // pred_fallthru
    _
  %v17 = vld [vmem:[%s0] sm:$0x1]
  %v18 = vld [vmem:[%s0 + $0x1] sm:$0x1]
  %v19 = vld [vmem:[%s1] sm:$0xff]
  %v20 = vld [vmem:[%s1 + $0x20] sm:$0xff]
  %v21 = vld [vmem:[%s1 + $0x40] sm:$0xff]
  %v22 = vld [vmem:[%s1 + $0x60] sm:$0xff]
  %v23 = vld [vmem:[%s1 + $0x80] sm:$0xff]
  %v24 = vld [vmem:[%s1 + $0xa0] sm:$0xff]
  %v25 = vld [vmem:[%s1 + $0xc0] sm:$0xff]
  %v26 = vld [vmem:[%s1 + $0xe0] sm:$0xff]
  %v27 = vld [vmem:[%s1 + $0x100] sm:$0xff]
  %v28 = vld [vmem:[%s1 + $0x120] sm:$0xff]
  %v29 = vld [vmem:[%s1 + $0x140] sm:$0xff]
  %v30 = vld [vmem:[%s1 + $0x160] sm:$0xff]
  %v31 = vld [vmem:[%s1 + $0x180] sm:$0xff]
  %v32 = vld [vmem:[%s1 + $0x1a0] sm:$0xff]
  %v33 = vld [vmem:[%s1 + $0x1c0] sm:$0xff]
  %v34 = vld [vmem:[%s1 + $0x1e0] sm:$0xff]
  %v35 = vld [vmem:[%s1 + $0x200] sm:$0xff]
  %v36 = vld [vmem:[%s1 + $0x220] sm:$0xff]
  %v37 = vld [vmem:[%s1 + $0x240] sm:$0xff]
  %v38 = vld [vmem:[%s1 + $0x260] sm:$0xff]
  %v39 = vld [vmem:[%s1 + $0x280] sm:$0xff]
  %v40 = vld [vmem:[%s1 + $0x2a0] sm:$0xff]
  %v41 = vld [vmem:[%s1 + $0x2c0] sm:$0xff]
  %v42 = vld [vmem:[%s1 + $0x2e0] sm:$0xff]
  %v43 = vld [vmem:[%s1 + $0x300] sm:$0xff]
  %v44 = vlaneseq
  %v45 = vshrl.u32 %v44, 7
  %v46 = vsub.s32 0, %v45
  %v47 = vrot.slane %v17, %v46
  %v48 = vmul.f32 %v19, %v47
  %v49 = vmul.f32 %v20, %v47
  %v50 = vmul.f32 %v21, %v47
  %v51 = vmul.f32 %v22, %v47
  %v52 = vmul.f32 %v23, %v47
  %v53 = vmul.f32 %v24, %v47
  %v54 = vmul.f32 %v25, %v47
  %v55 = vmul.f32 %v26, %v47
  %v56 = vmul.f32 %v27, %v47
  %v57 = vmul.f32 %v28, %v47
  %v58 = vmul.f32 %v29, %v47
  %v59 = vmul.f32 %v30, %v47
  %v60 = vmul.f32 %v31, %v47
  %v61 = vmul.f32 %v32, %v47
  %v62 = vmul.f32 %v33, %v47
  %v63 = vmul.f32 %v34, %v47
  %v64 = vmul.f32 %v35, %v47
  %v65 = vmul.f32 %v36, %v47
  %v66 = vmul.f32 %v37, %v47
  %v67 = vmul.f32 %v38, %v47
  %v68 = vmul.f32 %v39, %v47
  %v69 = vmul.f32 %v40, %v47
  %v70 = vmul.f32 %v41, %v47
  %v71 = vmul.f32 %v42, %v47
  %v72 = vmul.f32 %v43, %v47
  %v73 = vld [vmem:[%s1 + $0x8] sm:$0xff]
  %v74 = vld [vmem:[%s1 + $0x28] sm:$0xff]
  %v75 = vld [vmem:[%s1 + $0x48] sm:$0xff]
  %v76 = vld [vmem:[%s1 + $0x68] sm:$0xff]
  %v77 = vld [vmem:[%s1 + $0x88] sm:$0xff]
  %v78 = vld [vmem:[%s1 + $0xa8] sm:$0xff]
  %v79 = vld [vmem:[%s1 + $0xc8] sm:$0xff]
  %v80 = vld [vmem:[%s1 + $0xe8] sm:$0xff]
  %v81 = vld [vmem:[%s1 + $0x108] sm:$0xff]
  %v82 = vld [vmem:[%s1 + $0x128] sm:$0xff]
  %v83 = vld [vmem:[%s1 + $0x148] sm:$0xff]
  %v84 = vld [vmem:[%s1 + $0x168] sm:$0xff]
  %v85 = vld [vmem:[%s1 + $0x188] sm:$0xff]
  %v86 = vld [vmem:[%s1 + $0x1a8] sm:$0xff]
  %v87 = vld [vmem:[%s1 + $0x1c8] sm:$0xff]
  %v88 = vld [vmem:[%s1 + $0x1e8] sm:$0xff]
  %v89 = vld [vmem:[%s1 + $0x208] sm:$0xff]
  %v90 = vld [vmem:[%s1 + $0x228] sm:$0xff]
  %v91 = vld [vmem:[%s1 + $0x248] sm:$0xff]
  %v92 = vld [vmem:[%s1 + $0x268] sm:$0xff]
  %v93 = vld [vmem:[%s1 + $0x288] sm:$0xff]
  %v94 = vld [vmem:[%s1 + $0x2a8] sm:$0xff]
  %v95 = vld [vmem:[%s1 + $0x2c8] sm:$0xff]
  %v96 = vld [vmem:[%s1 + $0x2e8] sm:$0xff]
  %v97 = vld [vmem:[%s1 + $0x308] sm:$0xff]
  %v98 = vadd.f32 %v48, %v73
  %v99 = vadd.f32 %v49, %v74
  %v100 = vadd.f32 %v50, %v75
  %v101 = vadd.f32 %v51, %v76
  %v102 = vadd.f32 %v52, %v77
  %v103 = vadd.f32 %v53, %v78
  %v104 = vadd.f32 %v54, %v79
  %v105 = vadd.f32 %v55, %v80
  %v106 = vadd.f32 %v56, %v81
  %v107 = vadd.f32 %v57, %v82
  %v108 = vadd.f32 %v58, %v83
  %v109 = vadd.f32 %v59, %v84
  %v110 = vadd.f32 %v60, %v85
  %v111 = vadd.f32 %v61, %v86
  %v112 = vadd.f32 %v62, %v87
  %v113 = vadd.f32 %v63, %v88
  %v114 = vadd.f32 %v64, %v89
  %v115 = vadd.f32 %v65, %v90
  %v116 = vadd.f32 %v66, %v91
  %v117 = vadd.f32 %v67, %v92
  %v118 = vadd.f32 %v68, %v93
  %v119 = vadd.f32 %v69, %v94
  %v120 = vadd.f32 %v70, %v95
  %v121 = vadd.f32 %v71, %v96
  %v122 = vadd.f32 %v72, %v97
  %v123 = vtanh.pop %v98
  %v124 = vtanh.pop %v99
  %v125 = vtanh.pop %v100
  %v126 = vtanh.pop %v101
  %v127 = vtanh.pop %v102
  %v128 = vtanh.pop %v103
  %v129 = vtanh.pop %v104
  %v130 = vtanh.pop %v105
  %v131 = vtanh.pop %v106
  %v132 = vtanh.pop %v107
  %v133 = vtanh.pop %v108
  %v134 = vtanh.pop %v109
  %v135 = vtanh.pop %v110
  %v136 = vtanh.pop %v111
  %v137 = vtanh.pop %v112
  %v138 = vtanh.pop %v113
  %v139 = vtanh.pop %v114
  %v140 = vtanh.pop %v115
  %v141 = vtanh.pop %v116
  %v142 = vtanh.pop %v117
  %v143 = vtanh.pop %v118
  %v144 = vtanh.pop %v119
  %v145 = vtanh.pop %v120
  %v146 = vtanh.pop %v121
  %v147 = vtanh.pop %v122
  %v148 = vld [vmem:[%s2] sm:$0x33]
  %v149 = vld [vmem:[%s3] sm:$0x3]
  %v151 = vcombine.high %v148, %v148
  %vm152 = vcmask 588800
  %v153 = vsel %vm152, %v151, 0
  %155 = vmatprep.subr.mxu0 0.0
  %156 = vmatpush1.msra.mxu0 %v123
  %157 = vmatprep.subr.mxu0 0.0
  %158 = vmatpush1.msra.mxu0 %v124
  %159 = vmatprep.subr.mxu0 0.0
  %160 = vmatpush1.msra.mxu0 %v125
  %161 = vmatprep.subr.mxu0 0.0
  %162 = vmatpush1.msra.mxu0 %v126
  %163 = vmatprep.subr.mxu0 0.0
  %164 = vmatpush1.msra.mxu0 %v127
  %165 = vmatprep.subr.mxu0 0.0
  %166 = vmatpush1.msra.mxu0 %v128
  %167 = vmatprep.subr.mxu0 0.0
  %168 = vmatpush1.msra.mxu0 %v129
  %169 = vmatprep.subr.mxu0 0.0
  %170 = vmatpush1.msra.mxu0 %v130
  %171 = vmatprep.subr.mxu0 0.0
  %172 = vmatpush1.msra.mxu0 %v131
  %173 = vmatprep.subr.mxu0 0.0
  %174 = vmatpush1.msra.mxu0 %v132
  %175 = vmatprep.subr.mxu0 0.0
  %176 = vmatpush1.msra.mxu0 %v133
  %177 = vmatprep.subr.mxu0 0.0
  %178 = vmatpush1.msra.mxu0 %v134
  %179 = vmatprep.subr.mxu0 0.0
  %180 = vmatpush1.msra.mxu0 %v135
  %181 = vmatprep.subr.mxu0 0.0
  %182 = vmatpush1.msra.mxu0 %v136
  %183 = vmatprep.subr.mxu0 0.0
  %184 = vmatpush1.msra.mxu0 %v137
  %185 = vmatprep.subr.mxu0 0.0
  %186 = vmatpush1.msra.mxu0 %v138
  %187 = vmatprep.subr.mxu0 0.0
  %188 = vmatpush1.msra.mxu0 %v139
  %189 = vmatprep.subr.mxu0 0.0
  %190 = vmatpush1.msra.mxu0 %v140
  %191 = vmatprep.subr.mxu0 0.0
  %192 = vmatpush1.msra.mxu0 %v141
  %193 = vmatprep.subr.mxu0 0.0
  %194 = vmatpush1.msra.mxu0 %v142
  %195 = vmatprep.subr.mxu0 0.0
  %196 = vmatpush1.msra.mxu0 %v143
  %197 = vmatprep.subr.mxu0 0.0
  %198 = vmatpush1.msra.mxu0 %v144
  %199 = vmatprep.subr.mxu0 0.0
  %200 = vmatpush1.msra.mxu0 %v145
  %201 = vmatprep.subr.mxu0 0.0
  %202 = vmatpush1.msra.mxu0 %v146
  %203 = vmatprep.subr.mxu0 0.0
  %204 = vmatpush1.msra.mxu0 %v147
  %205 = vmatprep.subr.mxu0 0.0
  %206 = vmatpush1.msra.mxu0 0.0
  %207 = vmatprep.subr.mxu0 0.0
  %208 = vmatpush1.msra.mxu0 0.0
  %209 = vmatprep.subr.mxu0 0.0
  %210 = vmatpush1.msra.mxu0 0.0
  %211 = vmatprep.subr.mxu0 0.0
  %212 = vmatpush1.msra.mxu0 0.0
  %213 = vmatprep.subr.mxu0 0.0
  %214 = vmatpush1.msra.mxu0 0.0
  %215 = vmatprep.subr.mxu0 0.0
  %216 = vmatpush1.msra.mxu0 0.0
  %217 = vmatprep.subr.mxu0 0.0
  %218 = vmatpush1.msra.mxu0 0.0
  %219 = vmatprep.mubr.f32.mxu0 %v153
  %220 = vmatmul.mubr.f32.gmra.mrb[0].mxu0 %v148
  %v221 = vpop.f32.mrb[0].mxu0
  %v222 = vadd.f32 %v149, %v221
  %v223 = vpop.f32.mrb[0].mxu0
  %224 = vdwg.mxu0
  %v225 = vtanh.pop %v222
  %v226 = vadd.f32 %v17, -1.0
  %v227 = vmul.f32 %v226, 1.442695
  %v228 = vpow.pop %v227
  %v229 = vlaneseq
  %v230 = vshrl.u32 %v229, 7
  %v231 = vsub.s32 0, %v230
  %v232 = vrot.slane %v228, %v231
  %v233 = vmul.f32 %v232, %v225
  %v234 = vadd.f32 %v233, 1.0
  %235 = vst [vmem:[%s4] sm:$0x3] %v234
  %v236 = vld [vmem:[%s1 + $0x10] sm:$0xff]
  %v237 = vld [vmem:[%s1 + $0x30] sm:$0xff]
  %v238 = vld [vmem:[%s1 + $0x50] sm:$0xff]
  %v239 = vld [vmem:[%s1 + $0x70] sm:$0xff]
  %v240 = vld [vmem:[%s1 + $0x90] sm:$0xff]
  %v241 = vld [vmem:[%s1 + $0xb0] sm:$0xff]
  %v242 = vld [vmem:[%s1 + $0xd0] sm:$0xff]
  %v243 = vld [vmem:[%s1 + $0xf0] sm:$0xff]
  %v244 = vld [vmem:[%s1 + $0x110] sm:$0xff]
  %v245 = vld [vmem:[%s1 + $0x130] sm:$0xff]
  %v246 = vld [vmem:[%s1 + $0x150] sm:$0xff]
  %v247 = vld [vmem:[%s1 + $0x170] sm:$0xff]
  %v248 = vld [vmem:[%s1 + $0x190] sm:$0xff]
  %v249 = vld [vmem:[%s1 + $0x1b0] sm:$0xff]
  %v250 = vld [vmem:[%s1 + $0x1d0] sm:$0xff]
  %v251 = vld [vmem:[%s1 + $0x1f0] sm:$0xff]
  %v252 = vld [vmem:[%s1 + $0x210] sm:$0xff]
  %v253 = vld [vmem:[%s1 + $0x230] sm:$0xff]
  %v254 = vld [vmem:[%s1 + $0x250] sm:$0xff]
  %v255 = vld [vmem:[%s1 + $0x270] sm:$0xff]
  %v256 = vld [vmem:[%s1 + $0x290] sm:$0xff]
  %v257 = vld [vmem:[%s1 + $0x2b0] sm:$0xff]
  %v258 = vld [vmem:[%s1 + $0x2d0] sm:$0xff]
  %v259 = vld [vmem:[%s1 + $0x2f0] sm:$0xff]
  %v260 = vld [vmem:[%s1 + $0x310] sm:$0xff]
  %v261 = vlaneseq
  %v262 = vshrl.u32 %v261, 7
  %v263 = vsub.s32 0, %v262
  %v264 = vrot.slane %v18, %v263
  %v265 = vmul.f32 %v236, %v264
  %v266 = vmul.f32 %v237, %v264
  %v267 = vmul.f32 %v238, %v264
  %v268 = vmul.f32 %v239, %v264
  %v269 = vmul.f32 %v240, %v264
  %v270 = vmul.f32 %v241, %v264
  %v271 = vmul.f32 %v242, %v264
  %v272 = vmul.f32 %v243, %v264
  %v273 = vmul.f32 %v244, %v264
  %v274 = vmul.f32 %v245, %v264
  %v275 = vmul.f32 %v246, %v264
  %v276 = vmul.f32 %v247, %v264
  %v277 = vmul.f32 %v248, %v264
  %v278 = vmul.f32 %v249, %v264
  %v279 = vmul.f32 %v250, %v264
  %v280 = vmul.f32 %v251, %v264
  %v281 = vmul.f32 %v252, %v264
  %v282 = vmul.f32 %v253, %v264
  %v283 = vmul.f32 %v254, %v264
  %v284 = vmul.f32 %v255, %v264
  %v285 = vmul.f32 %v256, %v264
  %v286 = vmul.f32 %v257, %v264
  %v287 = vmul.f32 %v258, %v264
  %v288 = vmul.f32 %v259, %v264
  %v289 = vmul.f32 %v260, %v264
  %v290 = vld [vmem:[%s1 + $0x18] sm:$0xff]
  %v291 = vld [vmem:[%s1 + $0x38] sm:$0xff]
  %v292 = vld [vmem:[%s1 + $0x58] sm:$0xff]
  %v293 = vld [vmem:[%s1 + $0x78] sm:$0xff]
  %v294 = vld [vmem:[%s1 + $0x98] sm:$0xff]
  %v295 = vld [vmem:[%s1 + $0xb8] sm:$0xff]
  %v296 = vld [vmem:[%s1 + $0xd8] sm:$0xff]
  %v297 = vld [vmem:[%s1 + $0xf8] sm:$0xff]
  %v298 = vld [vmem:[%s1 + $0x118] sm:$0xff]
  %v299 = vld [vmem:[%s1 + $0x138] sm:$0xff]
  %v300 = vld [vmem:[%s1 + $0x158] sm:$0xff]
  %v301 = vld [vmem:[%s1 + $0x178] sm:$0xff]
  %v302 = vld [vmem:[%s1 + $0x198] sm:$0xff]
  %v303 = vld [vmem:[%s1 + $0x1b8] sm:$0xff]
  %v304 = vld [vmem:[%s1 + $0x1d8] sm:$0xff]
  %v305 = vld [vmem:[%s1 + $0x1f8] sm:$0xff]
  %v306 = vld [vmem:[%s1 + $0x218] sm:$0xff]
  %v307 = vld [vmem:[%s1 + $0x238] sm:$0xff]
  %v308 = vld [vmem:[%s1 + $0x258] sm:$0xff]
  %v309 = vld [vmem:[%s1 + $0x278] sm:$0xff]
  %v310 = vld [vmem:[%s1 + $0x298] sm:$0xff]
  %v311 = vld [vmem:[%s1 + $0x2b8] sm:$0xff]
  %v312 = vld [vmem:[%s1 + $0x2d8] sm:$0xff]
  %v313 = vld [vmem:[%s1 + $0x2f8] sm:$0xff]
  %v314 = vld [vmem:[%s1 + $0x318] sm:$0xff]
  %v315 = vadd.f32 %v265, %v290
  %v316 = vadd.f32 %v266, %v291
  %v317 = vadd.f32 %v267, %v292
  %v318 = vadd.f32 %v268, %v293
  %v319 = vadd.f32 %v269, %v294
  %v320 = vadd.f32 %v270, %v295
  %v321 = vadd.f32 %v271, %v296
  %v322 = vadd.f32 %v272, %v297
  %v323 = vadd.f32 %v273, %v298
  %v324 = vadd.f32 %v274, %v299
  %v325 = vadd.f32 %v275, %v300
  %v326 = vadd.f32 %v276, %v301
  %v327 = vadd.f32 %v277, %v302
  %v328 = vadd.f32 %v278, %v303
  %v329 = vadd.f32 %v279, %v304
  %v330 = vadd.f32 %v280, %v305
  %v331 = vadd.f32 %v281, %v306
  %v332 = vadd.f32 %v282, %v307
  %v333 = vadd.f32 %v283, %v308
  %v334 = vadd.f32 %v284, %v309
  %v335 = vadd.f32 %v285, %v310
  %v336 = vadd.f32 %v286, %v311
  %v337 = vadd.f32 %v287, %v312
  %v338 = vadd.f32 %v288, %v313
  %v339 = vadd.f32 %v289, %v314
  %v340 = vtanh.pop %v315
  %v341 = vtanh.pop %v316
  %v342 = vtanh.pop %v317
  %v343 = vtanh.pop %v318
  %v344 = vtanh.pop %v319
  %v345 = vtanh.pop %v320
  %v346 = vtanh.pop %v321
  %v347 = vtanh.pop %v322
  %v348 = vtanh.pop %v323
  %v349 = vtanh.pop %v324
  %v350 = vtanh.pop %v325
  %v351 = vtanh.pop %v326
  %v352 = vtanh.pop %v327
  %v353 = vtanh.pop %v328
  %v354 = vtanh.pop %v329
  %v355 = vtanh.pop %v330
  %v356 = vtanh.pop %v331
  %v357 = vtanh.pop %v332
  %v358 = vtanh.pop %v333
  %v359 = vtanh.pop %v334
  %v360 = vtanh.pop %v335
  %v361 = vtanh.pop %v336
  %v362 = vtanh.pop %v337
  %v363 = vtanh.pop %v338
  %v364 = vtanh.pop %v339
  %v365 = vld [vmem:[%s2] sm:$0xcc]
  %v366 = vld [vmem:[%s3 + $0x2] sm:$0x3]
  %v368 = vcombine.high %v365, %v365
  %v369 = vrot.slane %v365, 2
  %v370 = vrot.slane %v368, 2
  %v372 = vsel %vm152, %v370, 0
  %374 = vmatprep.subr.mxu0 0.0
  %375 = vmatpush1.msra.mxu0 %v340
  %376 = vmatprep.subr.mxu0 0.0
  %377 = vmatpush1.msra.mxu0 %v341
  %378 = vmatprep.subr.mxu0 0.0
  %379 = vmatpush1.msra.mxu0 %v342
  %380 = vmatprep.subr.mxu0 0.0
  %381 = vmatpush1.msra.mxu0 %v343
  %382 = vmatprep.subr.mxu0 0.0
  %383 = vmatpush1.msra.mxu0 %v344
  %384 = vmatprep.subr.mxu0 0.0
  %385 = vmatpush1.msra.mxu0 %v345
  %386 = vmatprep.subr.mxu0 0.0
  %387 = vmatpush1.msra.mxu0 %v346
  %388 = vmatprep.subr.mxu0 0.0
  %389 = vmatpush1.msra.mxu0 %v347
  %390 = vmatprep.subr.mxu0 0.0
  %391 = vmatpush1.msra.mxu0 %v348
  %392 = vmatprep.subr.mxu0 0.0
  %393 = vmatpush1.msra.mxu0 %v349
  %394 = vmatprep.subr.mxu0 0.0
  %395 = vmatpush1.msra.mxu0 %v350
  %396 = vmatprep.subr.mxu0 0.0
  %397 = vmatpush1.msra.mxu0 %v351
  %398 = vmatprep.subr.mxu0 0.0
  %399 = vmatpush1.msra.mxu0 %v352
  %400 = vmatprep.subr.mxu0 0.0
  %401 = vmatpush1.msra.mxu0 %v353
  %402 = vmatprep.subr.mxu0 0.0
  %403 = vmatpush1.msra.mxu0 %v354
  %404 = vmatprep.subr.mxu0 0.0
  %405 = vmatpush1.msra.mxu0 %v355
  %406 = vmatprep.subr.mxu0 0.0
  %407 = vmatpush1.msra.mxu0 %v356
  %408 = vmatprep.subr.mxu0 0.0
  %409 = vmatpush1.msra.mxu0 %v357
  %410 = vmatprep.subr.mxu0 0.0
  %411 = vmatpush1.msra.mxu0 %v358
  %412 = vmatprep.subr.mxu0 0.0
  %413 = vmatpush1.msra.mxu0 %v359
  %414 = vmatprep.subr.mxu0 0.0
  %415 = vmatpush1.msra.mxu0 %v360
  %416 = vmatprep.subr.mxu0 0.0
  %417 = vmatpush1.msra.mxu0 %v361
  %418 = vmatprep.subr.mxu0 0.0
  %419 = vmatpush1.msra.mxu0 %v362
  %420 = vmatprep.subr.mxu0 0.0
  %421 = vmatpush1.msra.mxu0 %v363
  %422 = vmatprep.subr.mxu0 0.0
  %423 = vmatpush1.msra.mxu0 %v364
  %424 = vmatprep.subr.mxu0 0.0
  %425 = vmatpush1.msra.mxu0 0.0
  %426 = vmatprep.subr.mxu0 0.0
  %427 = vmatpush1.msra.mxu0 0.0
  %428 = vmatprep.subr.mxu0 0.0
  %429 = vmatpush1.msra.mxu0 0.0
  %430 = vmatprep.subr.mxu0 0.0
  %431 = vmatpush1.msra.mxu0 0.0
  %432 = vmatprep.subr.mxu0 0.0
  %433 = vmatpush1.msra.mxu0 0.0
  %434 = vmatprep.subr.mxu0 0.0
  %435 = vmatpush1.msra.mxu0 0.0
  %436 = vmatprep.subr.mxu0 0.0
  %437 = vmatpush1.msra.mxu0 0.0
  %438 = vmatprep.mubr.f32.mxu0 %v372
  %439 = vmatmul.mubr.f32.gmra.mrb[0].mxu0 %v369
  %v440 = vpop.f32.mrb[0].mxu0
  %v441 = vadd.f32 %v366, %v440
  %v442 = vpop.f32.mrb[0].mxu0
  %443 = vdwg.mxu0
  %v444 = vtanh.pop %v441
  %v445 = vadd.f32 %v18, 1.0
  %v446 = vmul.f32 %v445, 1.442695
  %v447 = vpow.pop %v446
  %v448 = vlaneseq
  %v449 = vshrl.u32 %v448, 7
  %v450 = vsub.s32 0, %v449
  %v451 = vrot.slane %v447, %v450
  %v452 = vmul.f32 %v451, %v444
  %v453 = vadd.f32 %v452, 1.0
  %454 = vst [vmem:[%s4 + $0x2] sm:$0x3] %v453
  // Predicated region
  $region18: #{neury_forward.1} parent=0 // pred_check
    _
  $region19: #{neury_forward.1} parent=0 // pred_check_branch
    %456 = sbr.rel (0) target = $region21
  $region20: #{neury_forward.1} parent=0 // pred_region
    _
  $region21: #{neury_forward.1} parent=0 // pred_fallthru
    _
  // Predicated region
  $region22: #{neury_forward.1} parent=0 // pred_check
    _
  $region23: #{neury_forward.1} parent=0 // pred_check_branch
    %458 = sbr.rel (0) target = $region25
  $region24: #{neury_forward.1} parent=0 // pred_region
    _
  $region25: #{neury_forward.1} parent=0 // pred_fallthru
    _

</llo_original>
